<compile_context>
chip_gen: v5e
topology: v5e:2x2
jax: 0.10.0
libtpu: 0.0.40
codegen_flags: <defaults>
</compile_context>

<pallas_src>
import jax
import jax.numpy as jnp
from jax.experimental import pallas as pl
from jax.experimental.pallas import tpu as pltpu

_LANE = 128


# --------------------------------------------------------------------------- #
# Pallas kernels
# --------------------------------------------------------------------------- #
def _copy_kernel(x_ref, o_ref):
    """Identity copy of one (block_rows, C) VMEM tile."""
    o_ref[...] = x_ref[...]


def _dma_copy_kernel(x_hbm_ref, o_hbm_ref, sem):
    """Whole-array HBM->HBM copy via a single DMA (no VMEM staging)."""
    cp = pltpu.make_async_copy(x_hbm_ref, o_hbm_ref, sem)
    cp.start()
    cp.wait()


# --------------------------------------------------------------------------- #
# Layout helpers
# --------------------------------------------------------------------------- #
def _round_up(n, m):
    return ((n + m - 1) // m) * m


def _min_sublane(dtype):
    """Minimum second-minor tile for the dtype (clamped for sub-byte types)."""
    dt = jnp.dtype(dtype)
    if dt.name in ("int4", "uint4", "float4_e2m1fn"):
        return 64
    if dt.itemsize == 1:
        return 32            # int8 / fp8
    if dt.itemsize == 2:
        return 16            # bf16 / fp16
    return 8                 # f32 / i32 and wider


def _tile_target_bytes():
    """4 MiB tiles on v6e/v7x (32 MiB scoped-VMEM default -> ~16 MiB resident
    with in+out double buffering); 2 MiB on v5e / unknown (16 MiB default)."""
    try:
        kind = jax.devices()[0].device_kind.lower()
    except Exception:
        kind = ""
    if "v6" in kind or "v7" in kind:
        return 4 << 20
    return 2 << 20


def _choose_layout(total, itemsize, dtype):
    """Pick a lane-dense, pad-free 2D view (rows, C) and tile (block_rows, C).

    - C: largest multiple of 128 (<= 8192) that divides `total` -> unmasked,
      lane-dense stores with zero wrapper padding.
    - block_rows: multiple of the dtype's minimum sublane tile, sized for a
      2-4 MiB tile; the last row block may be partial (Pallas masks it).
    - grid >= 2 whenever the tensor spans more than one minimum tile so both
      v7x TensorCores get work.
    """
    s_min = _min_sublane(dtype)

    units = total // _LANE          # caller guarantees total % 128 == 0
    k = 1
    for cand in range(min(64, units), 0, -1):
        if units % cand == 0:
            k = cand
            break
    C = _LANE * k
    rows = total // C

    if rows <= s_min:
        # Tiny tensor: one block equal to the full array (always legal).
        return C, rows, rows, 1

    target_rows = max(
        s_min, (_tile_target_bytes() // (C * itemsize)) // s_min * s_min)
    block_rows = min(target_rows, _round_up(rows, s_min))
    if pl.cdiv(rows, block_rows) < 2:
        # Split mid-size tensors across >= 2 grid steps (v7x: 2 TensorCores).
        block_rows = _round_up(pl.cdiv(rows, 2), s_min)
    grid = pl.cdiv(rows, block_rows)
    return C, rows, block_rows, grid


# --------------------------------------------------------------------------- #
# Materialized copy (Pallas)
# --------------------------------------------------------------------------- #
def _materialized_copy(x):
    """One-read / one-write identity copy of x through a Pallas kernel."""
    total = x.size
    if total == 0:
        return x.reshape(-1)

    dtype = x.dtype
    itemsize = jnp.dtype(dtype).itemsize
    flat = x.reshape(-1)
    cost = pl.CostEstimate(flops=0, transcendentals=0,
                           bytes_accessed=2 * total * itemsize)

    if total % _LANE != 0:
        # Ragged total (rare): single direct HBM->HBM DMA. No padding, no
        # VMEM staging, no per-step pipelining overhead.
        return pl.pallas_call(
            _dma_copy_kernel,
            out_shape=jax.ShapeDtypeStruct((total,), dtype),
            in_specs=[pl.BlockSpec(memory_space=pl.ANY)],
            out_specs=pl.BlockSpec(memory_space=pl.ANY),
            scratch_shapes=[pltpu.SemaphoreType.DMA],
            cost_estimate=cost,
        )(flat)

    C, rows, block_rows, grid = _choose_layout(total, itemsize, dtype)
    flat2d = flat.reshape(rows, C)

    out2d = pl.pallas_call(
        _copy_kernel,
        out_shape=jax.ShapeDtypeStruct((rows, C), dtype),
        grid=(grid,),
        in_specs=[pl.BlockSpec((block_rows, C), lambda i: (i, 0))],
        out_specs=pl.BlockSpec((block_rows, C), lambda i: (i, 0)),
        compiler_params=pltpu.CompilerParams(
            dimension_semantics=("parallel",),
        ),
        cost_estimate=cost,
    )(flat2d)
    return out2d.reshape(-1)


# --------------------------------------------------------------------------- #
# torch.view-equivalent wrapper
# --------------------------------------------------------------------------- #
def _resolve_shape(new_shape, total):
    """torch.view-style shape resolution with a single optional -1."""
    shape = list(new_shape)
    neg = [i for i, s in enumerate(shape) if s == -1]
    if len(neg) > 1:
        raise ValueError("only one dimension may be -1")
    if neg:
        known = 1
        for j, s in enumerate(shape):
            if j != neg[0]:
                known *= s
        if known == 0 or total % known != 0:
            raise ValueError(f"cannot view {total} elements as {tuple(new_shape)}")
        shape[neg[0]] = total // known
    prod = 1
    for s in shape:
        prod *= s
    if prod != total:
        raise ValueError(f"cannot view {total} elements as {tuple(new_shape)}")
    return tuple(shape)


def tensor_reshaper(x, new_shape, *, materialize=False):
    """Pallas-backed equivalent of `x.view(new_shape)` (contiguous case).

    Default path is the zero-cost metadata-only reshape (what .view() is).
    `materialize=True` additionally routes the data through a Pallas
    identity-copy kernel (when an explicit copy is required).
    """
    shape = _resolve_shape(new_shape, x.size)
    if not materialize:
        # A contiguous .view() is metadata-only: no kernel, no HBM traffic.
        return x.reshape(shape)
    return _materialized_copy(x).reshape(shape)


class TensorReshaper:
    """Mirror of the PyTorch module: TensorReshaper(*shape)(x) == x.view(shape)."""

    def __init__(self, *shape):
        self.new_shape = shape

    def __call__(self, x, *, materialize=False):
        return tensor_reshaper(x, self.new_shape, materialize=materialize)


if __name__ == "__main__":
    key = jax.random.PRNGKey(0)
    k1, k2, k3 = jax.random.split(key, 3)

    # --- Case 1: module's config — NCHW (2, 4, 16, 16) -> (2, -1). -----------
    x = jax.random.normal(k1, (2, 4, 16, 16), dtype=jnp.float32)
    reshaper = TensorReshaper(2, -1)
    ref = x.reshape(2, -1)

    y_view = reshaper(x)                        # default path: metadata-only view
    jax.block_until_ready(y_view)
    assert y_view.shape == ref.shape and y_view.dtype == ref.dtype
    assert bool(jnp.array_equal(y_view, ref))

    y_copy = reshaper(x, materialize=True)      # Pallas tiled-copy path
    jax.block_until_ready(y_copy)
    assert y_copy.shape == ref.shape and y_copy.dtype == ref.dtype
    assert bool(jnp.array_equal(y_copy, ref))

    # --- Case 2: multi-block grid with a partial (masked) last row block. ----
    x2 = jax.random.normal(k2, (2, 97, 128), dtype=jnp.float32)
    y2 = TensorReshaper(97, -1)(x2, materialize=True)
    jax.block_until_ready(y2)
    assert bool(jnp.array_equal(y2, x2.reshape(97, -1)))

    # --- Case 3: total not divisible by 128 -> direct HBM->HBM DMA path. -----
    x3 = jax.random.normal(k3, (2, 4, 15, 11), dtype=jnp.float32)
    y3 = TensorReshaper(-1, 11)(x3, materialize=True)
    jax.block_until_ready(y3)
    assert bool(jnp.array_equal(y3, x3.reshape(-1, 11)))

    print("KERNEL_OK")
</pallas_src>

<mosaic_0001>
module attributes {stable_mosaic.version = 11 : i64} {
  func.func @_copy_kernel(%arg0: i32, %arg1: memref<1x2048xf32, #tpu.memory_space<vmem>>, %arg2: memref<1x2048xf32, #tpu.memory_space<vmem>>) attributes {dimension_semantics = [#tpu.dimension_semantics<parallel>], iteration_bounds = array<i64: 1>, scalar_prefetch = 0 : i64, scratch_operands = 0 : i64, tpu.core_type = #tpu.core_type<tc>, window_params = [{transform_indices = @transform_0, window_bounds = array<i64: 1, 2048>}, {transform_indices = @transform_1, window_bounds = array<i64: 1, 2048>}]} {
    %c0 = arith.constant 0 : index
    %c0_0 = arith.constant 0 : index
    %0 = vector.load %arg1[%c0, %c0_0] : memref<1x2048xf32, #tpu.memory_space<vmem>>, vector<1x2048xf32>
    %c0_1 = arith.constant 0 : index
    %c0_2 = arith.constant 0 : index
    %1 = vector.load %arg2[%c0_1, %c0_2] : memref<1x2048xf32, #tpu.memory_space<vmem>>, vector<1x2048xf32>
    tpu.vector_store %arg2[%c0_1, %c0_2], %0 {strides = array<i32>} : memref<1x2048xf32, #tpu.memory_space<vmem>>, vector<1x2048xf32>,
    return
  }
  func.func @transform_0(%arg0: i32) -> (i32, i32) {
    %c0_i32 = arith.constant 0 : i32
    %c0_i32_0 = arith.constant 0 : i32
    return %arg0, %c0_i32 : i32, i32
  }
  func.func @transform_1(%arg0: i32) -> (i32, i32) {
    %c0_i32 = arith.constant 0 : i32
    %c0_i32_0 = arith.constant 0 : i32
    return %arg0, %c0_i32 : i32, i32
  }
}

</mosaic_0001>

<llo_original>
// kernel: tpu_custom_call.1
$region0: #{tpu_custom_call.1}
  #allocation0 [shape = 'u32[]', space=smem, size = 0x4, offset = 0x4, fixed_abs, tag = 'smem constant byte address 0x4 - core index']
  #allocation1 [shape = 'u32[72,128]{1,0:T(1,128)}', space=vmem, size = 0x9000, scoped, tag = 'internal scratch']
  %s0 = inlined_call_operand.hbm [shape: f32[1,2048], index: 0, kind: input, shape index: {}]
  %s1 = inlined_call_operand.hbm [shape: f32[1,2048], index: 1, kind: output, shape index: {}]
  %s2 = sld [smem:[#allocation0]]
  $region18: #{tpu_custom_call.1} parent=0
    _
  %s4 = ssub.s32 1, %s2
  %s5 = scalar_select 0, %s4, %s2
  $region1: #{tpu_custom_call.1} parent=0
    #allocation2 [shape = 'u8[8192]{0}', space=vmem, size = 0x2000, scoped, tag = 'input window, operand 0, single buffered']
    #allocation3 [shape = 's32[1]{0}', space=sflag, size = 0x4, scoped, tag = 'scoped memory for tpu_custom_call.1']
    #allocation4 [shape = 's32[1]{0}', space=sflag, size = 0x4, scoped, tag = 'scoped memory for tpu_custom_call.1']
    #allocation5 [shape = 'u8[8192]{0}', space=vmem, size = 0x2000, scoped, tag = 'output window, operand 0, single buffered']
    %6 = vsyncpa [#allocation3], 0
    %7 = vsyncpa [#allocation4], 0
    // Predicated region
    $region2: #{tpu_custom_call.1} parent=1 // pred_check
      _
    $region3: #{tpu_custom_call.1} parent=1 // pred_check_branch
      %9 = sbr.rel (0) target = $region5
    $region4: #{tpu_custom_call.1} parent=1 // pred_region
      %11 = vsyncadd [#allocation3], 0
      %s13 = sshll.u32 %s0, 4
      %s14 = int_to_ptr.hbm [resolvable:$true] %s13
      %s15 = sshll.u32 [#allocation2], 4
      %s16 = int_to_ptr.vmem [resolvable:$true] %s15
      %18 = dma.hbm_to_vmem [thread:$0]  %s14, 256, %s16, [#allocation3]
    $region5: #{tpu_custom_call.1} parent=1 // pred_fallthru
      _
    // Predicated region
    $region6: #{tpu_custom_call.1} parent=1 // pred_check
      _
    $region7: #{tpu_custom_call.1} parent=1 // pred_check_branch
      %20 = sbr.rel (0) target = $region9
    $region8: #{tpu_custom_call.1} parent=1 // pred_region
      %22 = dma.done [#allocation3], 256
    $region9: #{tpu_custom_call.1} parent=1 // pred_fallthru
      _
    %v23 = vld [vmem:[#allocation2] sm:$0xff]
    %v24 = vld [vmem:[#allocation2 + $0x8] sm:$0xff]
    %25 = vst [vmem:[#allocation5] sm:$0xff] %v23
    %26 = vst [vmem:[#allocation5 + $0x8] sm:$0xff] %v24
    // Predicated region
    $region10: #{tpu_custom_call.1} parent=1 // pred_check
      _
    $region11: #{tpu_custom_call.1} parent=1 // pred_check_branch
      %28 = sbr.rel (0) target = $region13
    $region12: #{tpu_custom_call.1} parent=1 // pred_region
      %30 = vsyncadd [#allocation4], 0
      %s32 = sshll.u32 [#allocation5], 4
      %s33 = int_to_ptr.vmem [resolvable:$true] %s32
      %s34 = sshll.u32 %s1, 4
      %s35 = int_to_ptr.hbm [resolvable:$true] %s34
      %37 = dma.vmem_to_hbm [thread:$0]  %s33, 256, %s35, [#allocation4]
    $region13: #{tpu_custom_call.1} parent=1 // pred_fallthru
      _
    // Predicated region
    $region14: #{tpu_custom_call.1} parent=1 // pred_check
      _
    $region15: #{tpu_custom_call.1} parent=1 // pred_check_branch
      %39 = sbr.rel (0) target = $region17
    $region16: #{tpu_custom_call.1} parent=1 // pred_region
      %41 = dma.done [#allocation4], 256
    $region17: #{tpu_custom_call.1} parent=1 // pred_fallthru
      _
    %42 = vsyncpa [#allocation3], 1
    %43 = vsyncpa [#allocation4], 1

</llo_original>
